<compile_context>
chip_gen: v6e
topology: v6e:2x2x1
jax: 0.10.0
libtpu: 0.0.40
codegen_flags: <defaults>
</compile_context>

<pallas_src>
import functools

import jax
import jax.numpy as jnp
from jax.experimental import pallas as pl
from jax.experimental.pallas import tpu as pltpu


def _additive_attention_kernel(enc_ref, state_ref, w1t_ref, w2t_ref, wa_ref,
                               ba_ref, out_ref, attn_ref, *, seq_len):
    # enc_ref:   (TB, Sp, H)  encoder outputs for TB batch items (Sp = padded S)
    # state_ref: (L, TB, H)   encoder states (native RNN layout, layers first)
    # w1t_ref:   (H, A)       linear1 weight, transposed
    # w2t_ref:   (H, A)       linear2 weight, transposed
    # wa_ref:    (1, A)       attention weight (PyTorch (out=1, in=A) layout)
    # ba_ref:    (1,)         attention bias, scalar in SMEM
    # out_ref:   (TB, H)      context vectors (dense 2-D store)
    # attn_ref:  (TB, Sp)     attention weights, lane-dense, float32
    enc = enc_ref[...]                                        # (TB, Sp, H)
    tb, sp, h = enc.shape
    a = w1t_ref.shape[1]

    # mean over RNN-layer axis (== torch.mean(encoder_state, dim=0))
    avg = jnp.mean(state_ref[...].astype(jnp.float32), axis=0)        # (TB, H)

    # query = linear1(mean_state); broadcasting over S replaces .repeat().
    # bf16 MXU operands, f32 accumulation.
    query = jnp.dot(avg.astype(jnp.bfloat16),
                    w1t_ref[...].astype(jnp.bfloat16),
                    preferred_element_type=jnp.float32)               # (TB, A)

    # keys = linear2(encoder_output): one big (TB*Sp, H) x (H, A) MXU matmul.
    # Reshape the input-dtype block first (Sp is sublane-padded by the wrapper
    # so this is a free relayout), then cast to bf16 for the MXU.
    enc2d = enc.reshape(tb * sp, h)
    keys = jnp.dot(enc2d.astype(jnp.bfloat16),
                   w2t_ref[...].astype(jnp.bfloat16),
                   preferred_element_type=jnp.float32)                # (TB*Sp, A)
    keys = keys.reshape(tb, sp, a)                                    # (TB, Sp, A)

    # TODO(synk): on v6e/v7x the tanh could run in bf16 (~2x EUP throughput);
    # kept in f32 so the same kernel stays accurate on v5e (no bf16 EUP path).
    scored = jnp.tanh(query[:, None, :] + keys)                       # (TB, Sp, A)

    # scores = attention(scored).squeeze(-1): contract over A, add scalar bias.
    wa_row = wa_ref[...].astype(jnp.float32)                          # (1, A)
    scores = jnp.sum(scored * wa_row, axis=-1) + ba_ref[0]            # (TB, Sp)

    # mask the (static) sequence padding before the softmax
    if sp != seq_len:
        lane = jax.lax.broadcasted_iota(jnp.int32, (tb, sp), 1)
        scores = jnp.where(lane < seq_len, scores, -jnp.inf)

    # numerically-stable softmax over the sequence (lane) axis
    m = jnp.max(scores, axis=-1, keepdims=True)                       # (TB, 1)
    e = jnp.exp(scores - m)                                           # (TB, Sp)
    denom = jnp.sum(e, axis=-1, keepdims=True)
    attn = e * pl.reciprocal(denom, approx=True)                      # (TB, Sp) f32

    # context = sum_s attn[b,s] * enc[b,s,:] on the VPU/XLU; avoids TB
    # degenerate M=1 MXU matmuls (bmm with a size-1 query dim) and keeps f32.
    context = jnp.sum(attn[:, :, None] * enc.astype(jnp.float32), axis=1)  # (TB, H)

    out_ref[...] = context.astype(out_ref.dtype)
    attn_ref[...] = attn


def _tpu_generation_params():
    """Per-generation VMEM budget, scoped limit and TensorCore count."""
    is_v7 = False
    vmem_cap = None
    try:
        is_v7 = "v7" in jax.devices()[0].device_kind.lower()
    except Exception:
        pass
    try:
        vmem_cap = int(pltpu.get_tpu_info().vmem_capacity_bytes)
    except Exception:
        pass
    if is_v7 or (vmem_cap is not None and vmem_cap <= 64 * 1024 * 1024):
        # v7x-class: 64 MiB VMEM per TC, 2 TCs -> shard the batch grid axis,
        # leave headroom for compiler scratch / relayouts.
        return dict(vmem_budget=36 * 1024 * 1024,
                    vmem_limit=56 * 1024 * 1024,
                    num_cores=2)
    # v5e / v6e: 128 MiB VMEM, single TensorCore.
    return dict(vmem_budget=72 * 1024 * 1024,
                vmem_limit=100 * 1024 * 1024,
                num_cores=1)


def _choose_tiles(B, S_pad, H, L, A, *, in_itemsize, vmem_budget, num_cores,
                  mxu_align=256):
    """Pick (block_b, padded_B). block_b divides padded_B and is (8,128)-legal."""
    def footprint(tb):
        # double-buffered streaming inputs/outputs (input dtype / f32 attn)
        stream = 2 * (tb * S_pad * H + L * tb * H + tb * H) * in_itemsize
        stream += 2 * tb * S_pad * 4
        # single-buffered resident weights (f32)
        weights = (2 * H * A + A) * 4
        # in-kernel f32 temporaries (f32 enc copy + context product, keys,
        # scored, softmax rows, query/avg)
        scratch = (2 * tb * S_pad * H + 2 * tb * S_pad * A
                   + 4 * tb * S_pad + tb * (A + 2 * H)) * 4
        return stream + weights + scratch

    def legal_tiles(Bp):
        # second-to-last block dims must be a multiple of 8 or the full extent
        return [d for d in range(1, Bp + 1)
                if Bp % d == 0 and (d % 8 == 0 or d == Bp)]

    B_pad = B
    legal = legal_tiles(B_pad)
    fitting = [d for d in legal if footprint(d) <= vmem_budget]
    if not fitting:
        # nothing fits: pad the batch to a multiple of 8 so small 8-aligned
        # tiles become legal, then degrade to the smallest legal tile.
        B_pad = ((B + 7) // 8) * 8
        legal = legal_tiles(B_pad)
        fitting = [d for d in legal if footprint(d) <= vmem_budget] or [min(legal)]
    if num_cores > 1:
        # keep >= num_cores grid steps so the "parallel" batch axis can shard
        # across both v7x TensorCores (preference, not a hard constraint).
        sharded = [d for d in fitting if d <= B_pad // num_cores]
        if sharded:
            fitting = sharded
    # prefer an MXU-aligned M dimension (block_b * S_pad multiple of 256),
    # then the largest tile.
    block_b = max(fitting, key=lambda d: ((d * S_pad) % mxu_align == 0, d))
    return block_b, B_pad


def additive_attention_for_seq(encoder_output, encoder_state, w1, w2, wa, ba,
                               *, block_b=None):
    """encoder_output: (B, S, H); encoder_state: (L, B, H).
    w1, w2: (A, H); wa: (1, A); ba: (1,).
    Returns (output (B, 1, H), attention_weights (B, S) float32)."""
    B, S, H = encoder_output.shape
    L = encoder_state.shape[0]
    A = w1.shape[0]
    in_itemsize = encoder_output.dtype.itemsize

    gen = _tpu_generation_params()

    # pad the sequence axis to the sublane tile of the input dtype so the
    # in-kernel (TB, Sp, H) <-> (TB*Sp, H) reshape is a free relayout.
    sub = 16 if in_itemsize <= 2 else 8
    S_pad = ((S + sub - 1) // sub) * sub

    if block_b is None:
        block_b, B_pad = _choose_tiles(
            B, S_pad, H, L, A, in_itemsize=in_itemsize,
            vmem_budget=gen["vmem_budget"], num_cores=gen["num_cores"])
    else:
        B_pad = B
        assert B % block_b == 0 and (block_b % 8 == 0 or block_b == B)

    enc = encoder_output
    state = encoder_state
    if S_pad != S:
        enc = jnp.pad(enc, ((0, 0), (0, S_pad - S), (0, 0)))
    if B_pad != B:
        enc = jnp.pad(enc, ((0, B_pad - B), (0, 0), (0, 0)))
        state = jnp.pad(state, ((0, 0), (0, B_pad - B), (0, 0)))

    grid_b = B_pad // block_b
    w1t = w1.T                       # (H, A)
    w2t = w2.T                       # (H, A)
    ba1 = ba.reshape(1)              # scalar, lives in SMEM

    kernel = functools.partial(_additive_attention_kernel, seq_len=S)

    def _run(single_buffer_weights):
        def const_spec(shape):
            index_map = lambda b: (0,) * len(shape)
            if single_buffer_weights:
                # constant index_map: double-buffering buys nothing
                return pl.BlockSpec(shape, index_map,
                                    pipeline_mode=pl.Buffered(1))
            return pl.BlockSpec(shape, index_map)

        return pl.pallas_call(
            kernel,
            out_shape=(
                jax.ShapeDtypeStruct((B_pad, H), encoder_output.dtype),
                jax.ShapeDtypeStruct((B_pad, S_pad), jnp.float32),
            ),
            grid_spec=pltpu.PrefetchScalarGridSpec(
                num_scalar_prefetch=0,
                grid=(grid_b,),
                in_specs=[
                    pl.BlockSpec((block_b, S_pad, H), lambda b: (b, 0, 0)),
                    # native (L, B, H) layout -- no wrapper transpose needed
                    pl.BlockSpec((L, block_b, H), lambda b: (0, b, 0)),
                    const_spec((H, A)),
                    const_spec((H, A)),
                    const_spec((1, A)),
                    pl.BlockSpec(memory_space=pltpu.MemorySpace.SMEM),
                ],
                out_specs=[
                    pl.BlockSpec((block_b, H), lambda b: (b, 0)),      # dense 2-D
                    pl.BlockSpec((block_b, S_pad), lambda b: (b, 0)),  # lane-dense
                ],
            ),
            compiler_params=pltpu.CompilerParams(
                dimension_semantics=("parallel",),
                vmem_limit_bytes=gen["vmem_limit"],
            ),
        )(enc, state, w1t, w2t, wa, ba1)

    try:
        out2d, attn = _run(True)
    except Exception:
        # running JAX rejects pipeline_mode=pl.Buffered(1): fall back to the
        # default double-buffered weight specs.
        out2d, attn = _run(False)

    out = out2d[:B].reshape(B, 1, H)
    attn = attn[:B, :S]
    return out, attn


def _reference(encoder_output, encoder_state, w1, w2, wa, ba, seq_len):
    avg = jnp.mean(encoder_state, axis=0)[:, None, :]
    avg = jnp.tile(avg, (1, seq_len, 1))
    a1 = avg @ w1.T
    keys = encoder_output @ w2.T
    scores = (jnp.tanh(a1 + keys) @ wa.T + ba)[..., 0]
    attn = jax.nn.softmax(scores, axis=-1)
    out = jnp.einsum("bs,bsh->bh", attn, encoder_output)[:, None, :]
    return out, attn


if __name__ == "__main__":
    B, L, S, H, A = 2, 2, 8, 32, 16   # batch, state layers, seq_len, num_hidden, attention_size
    key = jax.random.PRNGKey(0)
    k1, k2, k3, k4, k5, k6 = jax.random.split(key, 6)

    encoder_output = jax.random.normal(k1, (B, S, H), dtype=jnp.float32)
    encoder_state = jax.random.normal(k2, (L, B, H), dtype=jnp.float32)
    # Deterministic synthetic parameters (PyTorch nn.Linear layout: (out, in)).
    w1 = 0.1 * jax.random.normal(k3, (A, H), dtype=jnp.float32)   # linear1.weight
    w2 = 0.1 * jax.random.normal(k4, (A, H), dtype=jnp.float32)   # linear2.weight
    wa = 0.1 * jax.random.normal(k5, (1, A), dtype=jnp.float32)   # attention.weight
    ba = 0.1 * jax.random.normal(k6, (1,), dtype=jnp.float32)     # attention.bias

    out, attn_w = additive_attention_for_seq(
        encoder_output, encoder_state, w1, w2, wa, ba)
    jax.block_until_ready((out, attn_w))

    ref_out, ref_attn = _reference(encoder_output, encoder_state, w1, w2, wa, ba, S)
    assert out.shape == (B, 1, H) and attn_w.shape == (B, S)
    # bf16 MXU operands + approx reciprocal -> slightly looser tolerance than
    # the pure-f32 version (accumulation, softmax and context stay f32).
    assert jnp.allclose(out, ref_out, atol=2e-2, rtol=2e-2), \
        float(jnp.max(jnp.abs(out - ref_out)))
    assert jnp.allclose(attn_w, ref_attn, atol=2e-2, rtol=2e-2), \
        float(jnp.max(jnp.abs(attn_w - ref_attn)))

    print("KERNEL_OK")
</pallas_src>

<mosaic_0001>
module attributes {stable_mosaic.version = 11 : i64} {
  func.func @_additive_attention_kernel(%arg0: i32, %arg1: memref<2x8x32xf32, #tpu.memory_space<vmem>>, %arg2: memref<2x2x32xf32, #tpu.memory_space<vmem>>, %arg3: memref<32x16xf32, #tpu.memory_space<vmem>>, %arg4: memref<32x16xf32, #tpu.memory_space<vmem>>, %arg5: memref<1x16xf32, #tpu.memory_space<vmem>>, %arg6: memref<1xf32, #tpu.memory_space<smem>>, %arg7: memref<2x32xf32, #tpu.memory_space<vmem>>, %arg8: memref<2x8xf32, #tpu.memory_space<vmem>>) attributes {dimension_semantics = [#tpu.dimension_semantics<parallel>], iteration_bounds = array<i64: 1>, scalar_prefetch = 0 : i64, scratch_operands = 0 : i64, tpu.core_type = #tpu.core_type<tc>, window_params = [{transform_indices = @transform_0, window_bounds = array<i64: 2, 8, 32>}, {transform_indices = @transform_1, window_bounds = array<i64: 2, 2, 32>}, {pipeline_mode = #tpu.pipeline_mode<synchronous>, transform_indices = @transform_2, window_bounds = array<i64: 32, 16>}, {pipeline_mode = #tpu.pipeline_mode<synchronous>, transform_indices = @transform_3, window_bounds = array<i64: 32, 16>}, {pipeline_mode = #tpu.pipeline_mode<synchronous>, transform_indices = @transform_4, window_bounds = array<i64: 1, 16>}, {transform_indices = @transform_5, window_bounds = array<i64: 1>}, {transform_indices = @transform_6, window_bounds = array<i64: 2, 32>}, {transform_indices = @transform_7, window_bounds = array<i64: 2, 8>}]} {
    %c0 = arith.constant 0 : index
    %c0_0 = arith.constant 0 : index
    %c0_1 = arith.constant 0 : index
    %0 = vector.load %arg1[%c0, %c0_0, %c0_1] : memref<2x8x32xf32, #tpu.memory_space<vmem>>, vector<2x8x32xf32>
    %c0_2 = arith.constant 0 : index
    %c0_3 = arith.constant 0 : index
    %c0_4 = arith.constant 0 : index
    %1 = vector.load %arg2[%c0_2, %c0_3, %c0_4] : memref<2x2x32xf32, #tpu.memory_space<vmem>>, vector<2x2x32xf32>
    %cst = arith.constant dense<0.000000e+00> : vector<2x32xf32>
    %2 = vector.multi_reduction <add>, %1, %cst [0] : vector<2x2x32xf32> to vector<2x32xf32>
    %cst_5 = arith.constant 2.000000e+00 : f32
    %3 = vector.broadcast %cst_5 : f32 to vector<2x32xf32>
    %4 = arith.divf %2, %3 : vector<2x32xf32>
    %5 = arith.truncf %4 : vector<2x32xf32> to vector<2x32xbf16>
    %c0_6 = arith.constant 0 : index
    %c0_7 = arith.constant 0 : index
    %6 = vector.load %arg3[%c0_6, %c0_7] : memref<32x16xf32, #tpu.memory_space<vmem>>, vector<32x16xf32>
    %7 = arith.truncf %6 : vector<32x16xf32> to vector<32x16xbf16>
    %cst_8 = arith.constant dense<0.000000e+00> : vector<2x16xf32>
    %8 = tpu.matmul %5, %7, %cst_8 {dimension_numbers = #tpu.dot_dimension_numbers<[1], [0], [0], [1], [0, 0, 1, 1], [], []>} : vector<2x32xbf16>, vector<32x16xbf16>, vector<2x16xf32> -> vector<2x16xf32>
    %9 = vector.shape_cast %0 : vector<2x8x32xf32> to vector<16x32xf32>
    %10 = arith.truncf %9 : vector<16x32xf32> to vector<16x32xbf16>
    %c0_9 = arith.constant 0 : index
    %c0_10 = arith.constant 0 : index
    %11 = vector.load %arg4[%c0_9, %c0_10] : memref<32x16xf32, #tpu.memory_space<vmem>>, vector<32x16xf32>
    %12 = arith.truncf %11 : vector<32x16xf32> to vector<32x16xbf16>
    %cst_11 = arith.constant dense<0.000000e+00> : vector<16x16xf32>
    %13 = tpu.matmul %10, %12, %cst_11 {dimension_numbers = #tpu.dot_dimension_numbers<[1], [0], [0], [1], [0, 0, 1, 1], [], []>} : vector<16x32xbf16>, vector<32x16xbf16>, vector<16x16xf32> -> vector<16x16xf32>
    %14 = vector.shape_cast %13 : vector<16x16xf32> to vector<2x8x16xf32>
    %15 = vector.shape_cast %8 : vector<2x16xf32> to vector<2x1x16xf32>
    %16 = vector.broadcast %15 : vector<2x1x16xf32> to vector<2x8x16xf32>
    %17 = arith.addf %16, %14 : vector<2x8x16xf32>
    %18 = math.tanh %17 : vector<2x8x16xf32>
    %c0_12 = arith.constant 0 : index
    %c0_13 = arith.constant 0 : index
    %19 = vector.load %arg5[%c0_12, %c0_13] : memref<1x16xf32, #tpu.memory_space<vmem>>, vector<1x16xf32>
    %20 = vector.shape_cast %19 : vector<1x16xf32> to vector<1x1x16xf32>
    %21 = vector.broadcast %20 : vector<1x1x16xf32> to vector<2x8x16xf32>
    %22 = arith.mulf %18, %21 : vector<2x8x16xf32>
    %cst_14 = arith.constant dense<0.000000e+00> : vector<2x8xf32>
    %23 = vector.multi_reduction <add>, %22, %cst_14 [2] : vector<2x8x16xf32> to vector<2x8xf32>
    %c0_15 = arith.constant 0 : index
    %24 = memref.load %arg6[%c0_15] : memref<1xf32, #tpu.memory_space<smem>>
    %25 = vector.broadcast %24 : f32 to vector<2x8xf32>
    %26 = arith.addf %23, %25 : vector<2x8xf32>
    %cst_16 = arith.constant dense<0xFF800000> : vector<2xf32>
    %27 = vector.multi_reduction <maximumf>, %26, %cst_16 [1] : vector<2x8xf32> to vector<2xf32>
    %28 = vector.shape_cast %27 : vector<2xf32> to vector<2x1xf32>
    %29 = vector.broadcast %28 : vector<2x1xf32> to vector<2x8xf32>
    %30 = arith.subf %26, %29 : vector<2x8xf32>
    %31 = math.exp %30 : vector<2x8xf32>
    %cst_17 = arith.constant dense<0.000000e+00> : vector<2xf32>
    %32 = vector.multi_reduction <add>, %31, %cst_17 [1] : vector<2x8xf32> to vector<2xf32>
    %33 = vector.shape_cast %32 : vector<2xf32> to vector<2x1xf32>
    %34 = tpu.reciprocal %33 {approx = true} : vector<2x1xf32> -> vector<2x1xf32>
    %35 = vector.broadcast %34 : vector<2x1xf32> to vector<2x8xf32>
    %36 = arith.mulf %31, %35 : vector<2x8xf32>
    %37 = vector.shape_cast %36 : vector<2x8xf32> to vector<2x8x1xf32>
    %38 = vector.broadcast %37 : vector<2x8x1xf32> to vector<2x8x32xf32>
    %39 = arith.mulf %38, %0 : vector<2x8x32xf32>
    %cst_18 = arith.constant dense<0.000000e+00> : vector<2x32xf32>
    %40 = vector.multi_reduction <add>, %39, %cst_18 [1] : vector<2x8x32xf32> to vector<2x32xf32>
    %c0_19 = arith.constant 0 : index
    %c0_20 = arith.constant 0 : index
    %41 = vector.load %arg7[%c0_19, %c0_20] : memref<2x32xf32, #tpu.memory_space<vmem>>, vector<2x32xf32>
    tpu.vector_store %arg7[%c0_19, %c0_20], %40 {strides = array<i32>} : memref<2x32xf32, #tpu.memory_space<vmem>>, vector<2x32xf32>,
    %c0_21 = arith.constant 0 : index
    %c0_22 = arith.constant 0 : index
    %42 = vector.load %arg8[%c0_21, %c0_22] : memref<2x8xf32, #tpu.memory_space<vmem>>, vector<2x8xf32>
    tpu.vector_store %arg8[%c0_21, %c0_22], %36 {strides = array<i32>} : memref<2x8xf32, #tpu.memory_space<vmem>>, vector<2x8xf32>,
    return
  }
  func.func @transform_0(%arg0: i32) -> (i32, i32, i32) {
    %c0_i32 = arith.constant 0 : i32
    %c0_i32_0 = arith.constant 0 : i32
    %c0_i32_1 = arith.constant 0 : i32
    return %arg0, %c0_i32, %c0_i32_0 : i32, i32, i32
  }
  func.func @transform_1(%arg0: i32) -> (i32, i32, i32) {
    %c0_i32 = arith.constant 0 : i32
    %c0_i32_0 = arith.constant 0 : i32
    %c0_i32_1 = arith.constant 0 : i32
    return %c0_i32, %arg0, %c0_i32_0 : i32, i32, i32
  }
  func.func @transform_2(%arg0: i32) -> (i32, i32) {
    %c0_i32 = arith.constant 0 : i32
    %c0_i32_0 = arith.constant 0 : i32
    %c0_i32_1 = arith.constant 0 : i32
    return %c0_i32, %c0_i32_0 : i32, i32
  }
  func.func @transform_3(%arg0: i32) -> (i32, i32) {
    %c0_i32 = arith.constant 0 : i32
    %c0_i32_0 = arith.constant 0 : i32
    %c0_i32_1 = arith.constant 0 : i32
    return %c0_i32, %c0_i32_0 : i32, i32
  }
  func.func @transform_4(%arg0: i32) -> (i32, i32) {
    %c0_i32 = arith.constant 0 : i32
    %c0_i32_0 = arith.constant 0 : i32
    %c0_i32_1 = arith.constant 0 : i32
    return %c0_i32, %c0_i32_0 : i32, i32
  }
  func.func @transform_5(%arg0: i32) -> i32 {
    %c0_i32 = arith.constant 0 : i32
    %c0_i32_0 = arith.constant 0 : i32
    return %c0_i32 : i32
  }
  func.func @transform_6(%arg0: i32) -> (i32, i32) {
    %c0_i32 = arith.constant 0 : i32
    %c0_i32_0 = arith.constant 0 : i32
    return %arg0, %c0_i32 : i32, i32
  }
  func.func @transform_7(%arg0: i32) -> (i32, i32) {
    %c0_i32 = arith.constant 0 : i32
    %c0_i32_0 = arith.constant 0 : i32
    return %arg0, %c0_i32 : i32, i32
  }
}

module attributes {stable_mosaic.version = 11 : i64} {
  func.func @_additive_attention_kernel(%arg0: i32, %arg1: memref<2x8x32xf32, #tpu.memory_space<vmem>>, %arg2: memref<2x2x32xf32, #tpu.memory_space<vmem>>, %arg3: memref<32x16xf32, #tpu.memory_space<vmem>>, %arg4: memref<32x16xf32, #tpu.memory_space<vmem>>, %arg5: memref<1x16xf32, #tpu.memory_space<vmem>>, %arg6: memref<1xf32, #tpu.memory_space<smem>>, %arg7: memref<2x32xf32, #tpu.memory_space<vmem>>, %arg8: memref<2x8xf32, #tpu.memory_space<vmem>>) attributes {dimension_semantics = [#tpu.dimension_semantics<parallel>], iteration_bounds = array<i64: 1>, scalar_prefetch = 0 : i64, scratch_operands = 0 : i64, tpu.core_type = #tpu.core_type<tc>, window_params = [{transform_indices = @transform_0, window_bounds = array<i64: 2, 8, 32>}, {transform_indices = @transform_1, window_bounds = array<i64: 2, 2, 32>}, {pipeline_mode = #tpu.pipeline_mode<synchronous>, transform_indices = @transform_2, window_bounds = array<i64: 32, 16>}, {pipeline_mode = #tpu.pipeline_mode<synchronous>, transform_indices = @transform_3, window_bounds = array<i64: 32, 16>}, {pipeline_mode = #tpu.pipeline_mode<synchronous>, transform_indices = @transform_4, window_bounds = array<i64: 1, 16>}, {transform_indices = @transform_5, window_bounds = array<i64: 1>}, {transform_indices = @transform_6, window_bounds = array<i64: 2, 32>}, {transform_indices = @transform_7, window_bounds = array<i64: 2, 8>}]} {
    %c0 = arith.constant 0 : index
    %c0_0 = arith.constant 0 : index
    %c0_1 = arith.constant 0 : index
    %0 = vector.load %arg1[%c0, %c0_0, %c0_1] : memref<2x8x32xf32, #tpu.memory_space<vmem>>, vector<2x8x32xf32>
    %c0_2 = arith.constant 0 : index
    %c0_3 = arith.constant 0 : index
    %c0_4 = arith.constant 0 : index
    %1 = vector.load %arg2[%c0_2, %c0_3, %c0_4] : memref<2x2x32xf32, #tpu.memory_space<vmem>>, vector<2x2x32xf32>
    %cst = arith.constant dense<0.000000e+00> : vector<2x32xf32>
    %2 = vector.multi_reduction <add>, %1, %cst [0] : vector<2x2x32xf32> to vector<2x32xf32>
    %cst_5 = arith.constant 2.000000e+00 : f32
    %3 = vector.broadcast %cst_5 : f32 to vector<2x32xf32>
    %4 = arith.divf %2, %3 : vector<2x32xf32>
    %5 = arith.truncf %4 : vector<2x32xf32> to vector<2x32xbf16>
    %c0_6 = arith.constant 0 : index
    %c0_7 = arith.constant 0 : index
    %6 = vector.load %arg3[%c0_6, %c0_7] : memref<32x16xf32, #tpu.memory_space<vmem>>, vector<32x16xf32>
    %7 = arith.truncf %6 : vector<32x16xf32> to vector<32x16xbf16>
    %cst_8 = arith.constant dense<0.000000e+00> : vector<2x16xf32>
    %8 = tpu.matmul %5, %7, %cst_8 {dimension_numbers = #tpu.dot_dimension_numbers<[1], [0], [0], [1], [0, 0, 1, 1], [], []>} : vector<2x32xbf16>, vector<32x16xbf16>, vector<2x16xf32> -> vector<2x16xf32>
    %9 = vector.shape_cast %0 : vector<2x8x32xf32> to vector<16x32xf32>
    %10 = arith.truncf %9 : vector<16x32xf32> to vector<16x32xbf16>
    %c0_9 = arith.constant 0 : index
    %c0_10 = arith.constant 0 : index
    %11 = vector.load %arg4[%c0_9, %c0_10] : memref<32x16xf32, #tpu.memory_space<vmem>>, vector<32x16xf32>
    %12 = arith.truncf %11 : vector<32x16xf32> to vector<32x16xbf16>
    %cst_11 = arith.constant dense<0.000000e+00> : vector<16x16xf32>
    %13 = tpu.matmul %10, %12, %cst_11 {dimension_numbers = #tpu.dot_dimension_numbers<[1], [0], [0], [1], [0, 0, 1, 1], [], []>} : vector<16x32xbf16>, vector<32x16xbf16>, vector<16x16xf32> -> vector<16x16xf32>
    %14 = vector.shape_cast %13 : vector<16x16xf32> to vector<2x8x16xf32>
    %15 = vector.shape_cast %8 : vector<2x16xf32> to vector<2x1x16xf32>
    %16 = vector.broadcast %15 : vector<2x1x16xf32> to vector<2x8x16xf32>
    %17 = arith.addf %16, %14 : vector<2x8x16xf32>
    %18 = math.tanh %17 : vector<2x8x16xf32>
    %c0_12 = arith.constant 0 : index
    %c0_13 = arith.constant 0 : index
    %19 = vector.load %arg5[%c0_12, %c0_13] : memref<1x16xf32, #tpu.memory_space<vmem>>, vector<1x16xf32>
    %20 = vector.shape_cast %19 : vector<1x16xf32> to vector<1x1x16xf32>
    %21 = vector.broadcast %20 : vector<1x1x16xf32> to vector<2x8x16xf32>
    %22 = arith.mulf %18, %21 : vector<2x8x16xf32>
    %cst_14 = arith.constant dense<0.000000e+00> : vector<2x8xf32>
    %23 = vector.multi_reduction <add>, %22, %cst_14 [2] : vector<2x8x16xf32> to vector<2x8xf32>
    %c0_15 = arith.constant 0 : index
    %24 = memref.load %arg6[%c0_15] : memref<1xf32, #tpu.memory_space<smem>>
    %25 = vector.broadcast %24 : f32 to vector<2x8xf32>
    %26 = arith.addf %23, %25 : vector<2x8xf32>
    %cst_16 = arith.constant dense<0xFF800000> : vector<2xf32>
    %27 = vector.multi_reduction <maximumf>, %26, %cst_16 [1] : vector<2x8xf32> to vector<2xf32>
    %28 = vector.shape_cast %27 : vector<2xf32> to vector<2x1xf32>
    %29 = vector.broadcast %28 : vector<2x1xf32> to vector<2x8xf32>
    %30 = arith.subf %26, %29 : vector<2x8xf32>
    %31 = math.exp %30 : vector<2x8xf32>
    %cst_17 = arith.constant dense<0.000000e+00> : vector<2xf32>
    %32 = vector.multi_reduction <add>, %31, %cst_17 [1] : vector<2x8xf32> to vector<2xf32>
    %33 = vector.shape_cast %32 : vector<2xf32> to vector<2x1xf32>
    %34 = tpu.reciprocal %33 {approx = true} : vector<2x1xf32> -> vector<2x1xf32>
    %35 = vector.broadcast %34 : vector<2x1xf32> to vector<2x8xf32>
    %36 = arith.mulf %31, %35 : vector<2x8xf32>
    %37 = vector.shape_cast %36 : vector<2x8xf32> to vector<2x8x1xf32>
    %38 = vector.broadcast %37 : vector<2x8x1xf32> to vector<2x8x32xf32>
    %39 = arith.mulf %38, %0 : vector<2x8x32xf32>
    %cst_18 = arith.constant dense<0.000000e+00> : vector<2x32xf32>
    %40 = vector.multi_reduction <add>, %39, %cst_18 [1] : vector<2x8x32xf32> to vector<2x32xf32>
    %c0_19 = arith.constant 0 : index
    %c0_20 = arith.constant 0 : index
    %41 = vector.load %arg7[%c0_19, %c0_20] : memref<2x32xf32, #tpu.memory_space<vmem>>, vector<2x32xf32>
    tpu.vector_store %arg7[%c0_19, %c0_20], %40 {strides = array<i32>} : memref<2x32xf32, #tpu.memory_space<vmem>>, vector<2x32xf32>,
    %c0_21 = arith.constant 0 : index
    %c0_22 = arith.constant 0 : index
    %42 = vector.load %arg8[%c0_21, %c0_22] : memref<2x8xf32, #tpu.memory_space<vmem>>, vector<2x8xf32>
    tpu.vector_store %arg8[%c0_21, %c0_22], %36 {strides = array<i32>} : memref<2x8xf32, #tpu.memory_space<vmem>>, vector<2x8xf32>,
    return
  }
  func.func @transform_0(%arg0: i32) -> (i32, i32, i32) {
    %c0_i32 = arith.constant 0 : i32
    %c0_i32_0 = arith.constant 0 : i32
    %c0_i32_1 = arith.constant 0 : i32
    return %arg0, %c0_i32, %c0_i32_0 : i32, i32, i32
  }
  func.func @transform_1(%arg0: i32) -> (i32, i32, i32) {
    %c0_i32 = arith.constant 0 : i32
    %c0_i32_0 = arith.constant 0 : i32
    %c0_i32_1 = arith.constant 0 : i32
    return %c0_i32, %arg0, %c0_i32_0 : i32, i32, i32
  }
  func.func @transform_2(%arg0: i32) -> (i32, i32) {
    %c0_i32 = arith.constant 0 : i32
    %c0_i32_0 = arith.constant 0 : i32
    %c0_i32_1 = arith.constant 0 : i32
    return %c0_i32, %c0_i32_0 : i32, i32
  }
  func.func @transform_3(%arg0: i32) -> (i32, i32) {
    %c0_i32 = arith.constant 0 : i32
    %c0_i32_0 = arith.constant 0 : i32
    %c0_i32_1 = arith.constant 0 : i32
    return %c0_i32, %c0_i32_0 : i32, i32
  }
  func.func @transform_4(%arg0: i32) -> (i32, i32) {
    %c0_i32 = arith.constant 0 : i32
    %c0_i32_0 = arith.constant 0 : i32
    %c0_i32_1 = arith.constant 0 : i32
    return %c0_i32, %c0_i32_0 : i32, i32
  }
  func.func @transform_5(%arg0: i32) -> i32 {
    %c0_i32 = arith.constant 0 : i32
    %c0_i32_0 = arith.constant 0 : i32
    return %c0_i32 : i32
  }
  func.func @transform_6(%arg0: i32) -> (i32, i32) {
    %c0_i32 = arith.constant 0 : i32
    %c0_i32_0 = arith.constant 0 : i32
    return %arg0, %c0_i32 : i32, i32
  }
  func.func @transform_7(%arg0: i32) -> (i32, i32) {
    %c0_i32 = arith.constant 0 : i32
    %c0_i32_0 = arith.constant 0 : i32
    return %arg0, %c0_i32 : i32, i32
  }
}

</mosaic_0001>

<llo_original>
// kernel: tpu_custom_call.1
$region0: #{tpu_custom_call.1}
  #allocation0 [shape = 'u32[]', space=smem, size = 0x4, offset = 0x4, fixed_abs, tag = 'smem constant byte address 0x4 - core index']
  #allocation1 [shape = 'u32[144,128]{1,0:T(1,128)}', space=vmem, size = 0x12000, scoped, tag = 'internal scratch']
  #allocation2 [shape = 'f32[1]{0:T(128)S(6)}', space=smem, size = 0x200, scoped, tag = 'scoped memory for tpu_custom_call.1']
  %s0 = inlined_call_operand.vmem [shape: f32[2,8,32], index: 0, kind: input, shape index: {}]
  %s1 = inlined_call_operand.vmem [shape: f32[2,2,32], index: 1, kind: input, shape index: {}]
  %s2 = inlined_call_operand.vmem [shape: f32[32,16], index: 2, kind: input, shape index: {}]
  %s3 = inlined_call_operand.vmem [shape: f32[32,16], index: 3, kind: input, shape index: {}]
  %s4 = inlined_call_operand.vmem [shape: f32[1,16], index: 4, kind: input, shape index: {}]
  %s5 = inlined_call_operand.<no memory space> [shape: f32[1], index: 5, kind: input, shape index: {}]
  %s6 = inlined_call_operand.hbm [shape: f32[2,32], index: 6, kind: output, shape index: {0}]
  %s7 = inlined_call_operand.hbm [shape: f32[2,8], index: 7, kind: output, shape index: {1}]
  %8 = xla_tuple %s6, %s7
  %s9 = sld [smem:[#allocation0]]
  $region42: #{tpu_custom_call.1} parent=0
    _
  %s11 = ssub.s32 1, %s9
  %s12 = scalar_select 0, %s11, %s9
  %13 = sst [smem:[#allocation2]] %s5
  $region1: #{tpu_custom_call.1} parent=0
    #allocation3 [shape = 'u8[1024]{0}', space=vmem, size = 0x400, scoped, tag = 'output window, operand 0, single buffered']
    #allocation4 [shape = 's32[1]{0}', space=sflag, size = 0x4, scoped, tag = 'scoped memory for tpu_custom_call.1']
    #allocation5 [shape = 'u8[1024]{0}', space=vmem, size = 0x400, scoped, tag = 'output window, operand 1, single buffered']
    #allocation6 [shape = 's32[1]{0}', space=sflag, size = 0x4, scoped, tag = 'scoped memory for tpu_custom_call.1']
    %14 = vsyncpa [#allocation4], 0
    %15 = vsyncpa [#allocation6], 0
    // Predicated region
    $region2: #{tpu_custom_call.1} parent=1 // pred_check
      _
    $region3: #{tpu_custom_call.1} parent=1 // pred_check_branch
      %17 = sbr.rel (0) target = $region5
    $region4: #{tpu_custom_call.1} parent=1 // pred_region
      _
    $region5: #{tpu_custom_call.1} parent=1 // pred_fallthru
      _
    // Predicated region
    $region6: #{tpu_custom_call.1} parent=1 // pred_check
      _
    $region7: #{tpu_custom_call.1} parent=1 // pred_check_branch
      %19 = sbr.rel (0) target = $region9
    $region8: #{tpu_custom_call.1} parent=1 // pred_region
      _
    $region9: #{tpu_custom_call.1} parent=1 // pred_fallthru
      _
    // Predicated region
    $region10: #{tpu_custom_call.1} parent=1 // pred_check
      _
    $region11: #{tpu_custom_call.1} parent=1 // pred_check_branch
      %21 = sbr.rel (0) target = $region13
    $region12: #{tpu_custom_call.1} parent=1 // pred_region
      _
    $region13: #{tpu_custom_call.1} parent=1 // pred_fallthru
      _
    // Predicated region
    $region14: #{tpu_custom_call.1} parent=1 // pred_check
      _
    $region15: #{tpu_custom_call.1} parent=1 // pred_check_branch
      %23 = sbr.rel (0) target = $region17
    $region16: #{tpu_custom_call.1} parent=1 // pred_region
      _
    $region17: #{tpu_custom_call.1} parent=1 // pred_fallthru
      _
    // Predicated region
    $region18: #{tpu_custom_call.1} parent=1 // pred_check
      _
    $region19: #{tpu_custom_call.1} parent=1 // pred_check_branch
      %25 = sbr.rel (0) target = $region21
    $region20: #{tpu_custom_call.1} parent=1 // pred_region
      _
    $region21: #{tpu_custom_call.1} parent=1 // pred_fallthru
      _
    // Predicated region
    $region22: #{tpu_custom_call.1} parent=1 // pred_check
      _
    $region23: #{tpu_custom_call.1} parent=1 // pred_check_branch
      %27 = sbr.rel (0) target = $region25
    $region24: #{tpu_custom_call.1} parent=1 // pred_region
      _
    $region25: #{tpu_custom_call.1} parent=1 // pred_fallthru
      _
    %v29 = vld [vmem:[%s0] sm:$0xff]
    %v30 = vld [vmem:[%s0 + $0x8] sm:$0xff]
    %v31 = vld [vmem:[%s1] sm:$0x3]
    %v32 = vld [vmem:[%s1 + $0x2] sm:$0x3]
    %vm33 = vcmask 254976
    %v34 = vsel %vm33, %v31, 0.0
    %v35 = vsel %vm33, %v32, 0.0
    %v36 = vadd.f32 %v34, %v35
    %v37 = vrcp.pop 2.0
    %v38 = vmul.f32 %v36, %v37
    %v39 = vpack.c.bf16 %v38, %v38
    %v40 = vld [vmem:[%s2] sm:$0xff]
    %v41 = vld [vmem:[%s2 + $0x8] sm:$0xff]
    %v42 = vld [vmem:[%s2 + $0x10] sm:$0xff]
    %v43 = vld [vmem:[%s2 + $0x18] sm:$0xff]
    %v44 = vpack.c.bf16 %v41, %v40
    %v45 = vpack.c.bf16 %v43, %v42
    %vm46 = vcmask 261120
    %v48 = vsel %vm46, %v39, 0
    %50 = vmatprep.subr.bf16.mxu0 0
    %51 = vmatpush1.bf16.msra.mxu0 0
    %52 = vmatprep.subr.bf16.mxu0 0
    %53 = vmatpush1.bf16.msra.mxu0 0
    %54 = vmatprep.subr.bf16.mxu0 0
    %55 = vmatpush1.bf16.msra.mxu0 0
    %56 = vmatprep.subr.bf16.mxu0 0
    %57 = vmatpush1.bf16.msra.mxu0 0
    %58 = vmatprep.subr.bf16.mxu0 0
    %59 = vmatpush1.bf16.msra.mxu0 0
    %60 = vmatprep.subr.bf16.mxu0 0
    %61 = vmatpush1.bf16.msra.mxu0 0
    %62 = vmatprep.subr.bf16.mxu0 0
    %63 = vmatpush1.bf16.msra.mxu0 %v45
    %64 = vmatprep.subr.bf16.mxu0 0
    %65 = vmatpush1.bf16.msra.mxu0 %v44
    %66 = vmatprep.subr.bf16.mxu0 0
    %67 = vmatpush2.bf16.msra.mxu0 0
    %68 = vmatprep.subr.bf16.mxu0 0
    %69 = vmatpush2.bf16.msra.mxu0 0
    %70 = vmatprep.subr.bf16.mxu0 0
    %71 = vmatpush2.bf16.msra.mxu0 0
    %72 = vmatprep.subr.bf16.mxu0 0
    %73 = vmatpush2.bf16.msra.mxu0 0
    %74 = vmatprep.subr.bf16.mxu0 0
    %75 = vmatpush2.bf16.msra.mxu0 0
    %76 = vmatprep.subr.bf16.mxu0 0
    %77 = vmatpush2.bf16.msra.mxu0 0
    %78 = vmatprep.subr.bf16.mxu0 0
    %79 = vmatpush2.bf16.msra.mxu0 0
    %80 = vmatprep.subr.bf16.mxu0 0
    %81 = vmatpush2.bf16.msra.mxu0 0
    %82 = vmatprep.mubr.bf16.mxu0 0
    %83 = vmatmul.mubr.bf16.gmra.mxu0 %v48
    %v84 = vpop.f32.mrf.mxu0
    %v85 = vadd.f32 0.0, %v84
    %v86 = vpop.f32.mrf.mxu0
    %v87 = vpop.f32.mrf.mxu0
    %v88 = vpop.f32.mrf.mxu0
    %89 = vdwg.mxu0
    %v90 = vpack.c.bf16 %v30, %v29
    %v91 = vld [vmem:[%s3] sm:$0xff]
    %v92 = vld [vmem:[%s3 + $0x8] sm:$0xff]
    %v93 = vld [vmem:[%s3 + $0x10] sm:$0xff]
    %v94 = vld [vmem:[%s3 + $0x18] sm:$0xff]
    %v95 = vpack.c.bf16 %v92, %v91
    %v96 = vpack.c.bf16 %v94, %v93
    %v98 = vsel %vm46, %v90, 0
    %100 = vmatprep.subr.bf16.mxu0 0
    %101 = vmatpush1.bf16.msra.mxu0 0
    %102 = vmatprep.subr.bf16.mxu0 0
    %103 = vmatpush1.bf16.msra.mxu0 0
    %104 = vmatprep.subr.bf16.mxu0 0
    %105 = vmatpush1.bf16.msra.mxu0 0
    %106 = vmatprep.subr.bf16.mxu0 0
    %107 = vmatpush1.bf16.msra.mxu0 0
    %108 = vmatprep.subr.bf16.mxu0 0
    %109 = vmatpush1.bf16.msra.mxu0 0
    %110 = vmatprep.subr.bf16.mxu0 0
    %111 = vmatpush1.bf16.msra.mxu0 0
    %112 = vmatprep.subr.bf16.mxu0 0
    %113 = vmatpush1.bf16.msra.mxu0 %v96
    %114 = vmatprep.subr.bf16.mxu0 0
    %115 = vmatpush1.bf16.msra.mxu0 %v95
    %116 = vmatprep.subr.bf16.mxu0 0
    %117 = vmatpush2.bf16.msra.mxu0 0
    %118 = vmatprep.subr.bf16.mxu0 0
    %119 = vmatpush2.bf16.msra.mxu0 0
    %120 = vmatprep.subr.bf16.mxu0 0
    %121 = vmatpush2.bf16.msra.mxu0 0
    %122 = vmatprep.subr.bf16.mxu0 0
    %123 = vmatpush2.bf16.msra.mxu0 0
    %124 = vmatprep.subr.bf16.mxu0 0
    %125 = vmatpush2.bf16.msra.mxu0 0
    %126 = vmatprep.subr.bf16.mxu0 0
    %127 = vmatpush2.bf16.msra.mxu0 0
    %128 = vmatprep.subr.bf16.mxu0 0
    %129 = vmatpush2.bf16.msra.mxu0 0
    %130 = vmatprep.subr.bf16.mxu0 0
    %131 = vmatpush2.bf16.msra.mxu0 0
    %132 = vmatprep.mubr.bf16.mxu0 0
    %133 = vmatmul.mubr.bf16.gmra.mxu0 %v98
    %v134 = vpop.f32.mrf.mxu0
    %v135 = vadd.f32 0.0, %v134
    %v136 = vpop.f32.mrf.mxu0
    %v137 = vpop.f32.mrf.mxu0
    %v138 = vadd.f32 0.0, %v137
    %v139 = vpop.f32.mrf.mxu0
    %140 = vdwg.mxu0
    %v143 = vunpack.c.l.s4 1966171168
    %v144 = vunpack.c.0.s8 %v143
    %v145 = vlaneseq
    %v146 = vshrl.u32 %v145, 7
    %v147 = vsub.s32 %v144, %v146
    %v148 = vrot.slane %v85, %v147
    %v149 = vcombine.high %v148, %v148
    %v151 = vunpack.c.l.s4 1966171168
    %v152 = vunpack.c.0.s8 %v151
    %v153 = vlaneseq
    %v154 = vshrl.u32 %v153, 7
    %v155 = vsub.s32 %v152, %v154
    %v156 = vrot.slane %v148, %v155
    %v158 = vunpack.c.l.s4 1966171168
    %v159 = vunpack.c.0.s8 %v158
    %v160 = vlaneseq
    %v161 = vshrl.u32 %v160, 7
    %v162 = vsub.s32 %v159, %v161
    %v163 = vrot.slane %v149, %v162
    %v164 = vlaneseq
    %v165 = vshrl.u32 %v164, 7
    %v166 = vsub.s32 0, %v165
    %v167 = vrot.slane %v156, %v166
    %v168 = vlaneseq
    %v169 = vshrl.u32 %v168, 7
    %v170 = vsub.s32 0, %v169
    %v171 = vrot.slane %v163, %v170
    %v174 = vadd.f32 %v167, %v135
    %v175 = vadd.f32 %v171, %v138
    %v176 = vtanh.pop %v174
    %v177 = vtanh.pop %v175
    %v178 = vld [vmem:[%s4] sm:$0x1]
    %v180 = vlaneseq
    %v181 = vshrl.u32 %v180, 7
    %v182 = vsub.s32 0, %v181
    %v183 = vrot.slane %v178, %v182
    %v185 = vmul.f32 %v176, %v183
    %v186 = vmul.f32 %v177, %v183
    %vm187 = vcmask 130048
    %v188 = vsel %vm187, %v185, 0.0
    %189 = vadd.xlane.f32.xlu0 %v188
    %v190 = vpop.xlane.xlu0 %189
    %v191 = vsel %vm187, %v186, 0.0
    %192 = vadd.xlane.f32.xlu0 %v191
    %v193 = vpop.xlane.xlu0 %192
    %s194 = sld [smem:[#allocation2]]
    %v195 = vstv %s194
    %v196 = vadd.f32 %v190, %v195
    %v197 = vadd.f32 %v193, %v195
    %v200 = vlaneseq
    %v201 = vand.u32 %v200, 127
    %v202 = vlaneseq
    %v203 = vshrl.u32 %v202, 7
    %v204 = vsub.s32 %v201, %v203
    %v205 = vrot.slane %v196, %v204
    %v206 = vlaneseq
    %v207 = vshrl.u32 %v206, 7
    %v208 = vsub.s32 %v201, %v207
    %v209 = vrot.slane %v197, %v208
    %vm210 = vcmask 1041409
    %v211 = vsel %vm210, %v209, %v205
    %vm213 = vcmask 58368
    %v214 = vsel %vm213, %v211, -inf
    %215 = vmax.xlane.f32.xlu0 %v214
    %v216 = vpop.xlane.xlu0 %215
    %v218 = vlaneseq
    %v219 = vshrl.u32 %v218, 7
    %v220 = vsub.s32 0, %v219
    %v221 = vrot.slane %v216, %v220
    %v222 = vlaneseq
    %v223 = vshrl.u32 %v222, 7
    %v224 = vsub.s32 1, %v223
    %v225 = vrot.slane %v216, %v224
    %v228 = vsub.f32 %v196, %v221
    %v229 = vsub.f32 %v197, %v225
    %v230 = vmul.f32 %v228, 1.442695
    %v231 = vpow.pop %v230
    %v232 = vmul.f32 %v229, 1.442695
    %v233 = vpow.pop %v232
    %236 = vset.pattern.permute.xlu0 0
    %237 = vperm.xlu0 %236, %v231
    %v238 = vpop.permute.xlu0 %237
    %239 = vset.pattern.permute.xlu0 0
    %240 = vperm.xlu0 %239, %v233
    %v241 = vpop.permute.xlu0 %240
    %v242 = vlaneseq
    %v243 = vshrl.u32 %v242, 7
    %v244 = vsub.s32 %v201, %v243
    %v245 = vrot.slane %v238, %v244
    %v246 = vlaneseq
    %v247 = vshrl.u32 %v246, 7
    %v248 = vsub.s32 %v201, %v247
    %v249 = vrot.slane %v241, %v248
    %v250 = vsel %vm210, %v249, %v245
    %v252 = vsel %vm213, %v250, 0.0
    %253 = vadd.xlane.f32.xlu0 %v252
    %v254 = vpop.xlane.xlu0 %253
    %v255 = vrcp.pop %v254
    %v257 = vlaneseq
    %v258 = vshrl.u32 %v257, 7
    %v259 = vsub.s32 0, %v258
    %v260 = vrot.slane %v255, %v259
    %v261 = vlaneseq
    %v262 = vshrl.u32 %v261, 7
    %v263 = vsub.s32 1, %v262
    %v264 = vrot.slane %v255, %v263
    %v267 = vmul.f32 %v231, %v260
    %v268 = vmul.f32 %v233, %v264
    %270 = vset.pattern.permute.xlu0 0
    %271 = vperm.xlu0 %270, %v267
    %v272 = vpop.permute.xlu0 %271
    %275 = vset.pattern.permute.xlu0 0
    %276 = vperm.xlu0 %275, %v268
    %v277 = vpop.permute.xlu0 %276
    %v279 = vmul.f32 %v272, %v29
    %v280 = vmul.f32 %v277, %v30
    %v281 = vsel %vm46, %v279, 0.0
    %v282 = vrot.slane %v281, 4
    %v283 = vadd.f32 %v281, %v282
    %v284 = vrot.slane %v283, 2
    %v285 = vadd.f32 %v283, %v284
    %v286 = vrot.slane %v285, 1
    %v287 = vadd.f32 %v285, %v286
    %v288 = vsel %vm46, %v280, 0.0
    %v289 = vrot.slane %v288, 4
    %v290 = vadd.f32 %v288, %v289
    %v291 = vrot.slane %v290, 2
    %v292 = vadd.f32 %v290, %v291
    %v293 = vrot.slane %v292, 1
    %v294 = vadd.f32 %v292, %v293
    %v297 = vsel %vm210, %v294, %v287
    %299 = vst.msk [vmem:[#allocation3] sm:$0x3] %vm33, %v297
    %v300 = vlaneseq
    %v301 = vshrl.u32 %v300, 7
    %v302 = vsub.s32 %v201, %v301
    %v303 = vrot.slane %v272, %v302
    %v304 = vlaneseq
    %v305 = vshrl.u32 %v304, 7
    %v306 = vsub.s32 %v201, %v305
    %v307 = vrot.slane %v277, %v306
    %v308 = vsel %vm210, %v307, %v303
    %310 = vst.msk [vmem:[#allocation5] sm:$0x3] %vm213, %v308
    // Predicated region
    $region26: #{tpu_custom_call.1} parent=1 // pred_check
      _
    $region27: #{tpu_custom_call.1} parent=1 // pred_check_branch
      %312 = sbr.rel (0) target = $region29
    $region28: #{tpu_custom_call.1} parent=1 // pred_region
      %s314 = ssub.s32 32, 32
      %315 = vsyncadd [#allocation4], %s314
      %s317 = sshll.u32 [#allocation3], 4
      %s318 = int_to_ptr.vmem [resolvable:$true] %s317
      %320 = dma.vmem_to_hbm [thread:$0]  %s318, 32, %s6, [#allocation4]
    $region29: #{tpu_custom_call.1} parent=1 // pred_fallthru
      _
    // Predicated region
    $region30: #{tpu_custom_call.1} parent=1 // pred_check
      _
    $region31: #{tpu_custom_call.1} parent=1 // pred_check_branch
      %322 = sbr.rel (0) target = $region33
    $region32: #{tpu_custom_call.1} parent=1 // pred_region
      %s324 = ssub.s32 32, 32
      %325 = vsyncadd [#allocation6], %s324
      %s327 = sshll.u32 [#allocation5], 4
      %s328 = int_to_ptr.vmem [resolvable:$true] %s327
      %330 = dma.vmem_to_hbm [thread:$0]  %s328, 32, %s7, [#allocation6]
    $region33: #{tpu_custom_call.1} parent=1 // pred_fallthru
      _
    // Predicated region
    $region34: #{tpu_custom_call.1} parent=1 // pred_check
      _
    $region35: #{tpu_custom_call.1} parent=1 // pred_check_branch
      %332 = sbr.rel (0) target = $region37
    $region36: #{tpu_custom_call.1} parent=1 // pred_region
      %333 = dma.done [#allocation4], 32
    $region37: #{tpu_custom_call.1} parent=1 // pred_fallthru
      _
    // Predicated region
    $region38: #{tpu_custom_call.1} parent=1 // pred_check
      _
    $region39: #{tpu_custom_call.1} parent=1 // pred_check_branch
      %335 = sbr.rel (0) target = $region41
    $region40: #{tpu_custom_call.1} parent=1 // pred_region
      %336 = dma.done [#allocation6], 32
    $region41: #{tpu_custom_call.1} parent=1 // pred_fallthru
      _
    %337 = vsyncpa [#allocation4], 1
    %338 = vsyncpa [#allocation6], 1

// kernel: tpu_custom_call.1
$region0: #{tpu_custom_call.1}
  #allocation0 [shape = 'u32[]', space=smem, size = 0x4, offset = 0x4, fixed_abs, tag = 'smem constant byte address 0x4 - core index']
  #allocation1 [shape = 'u32[144,128]{1,0:T(1,128)}', space=vmem, size = 0x12000, scoped, tag = 'internal scratch']
  #allocation2 [shape = 'f32[1]{0:T(128)S(6)}', space=smem, size = 0x200, scoped, tag = 'scoped memory for tpu_custom_call.1']
  %s0 = inlined_call_operand.vmem [shape: f32[2,8,32], index: 0, kind: input, shape index: {}]
  %s1 = inlined_call_operand.vmem [shape: f32[2,2,32], index: 1, kind: input, shape index: {}]
  %s2 = inlined_call_operand.vmem [shape: f32[32,16], index: 2, kind: input, shape index: {}]
  %s3 = inlined_call_operand.vmem [shape: f32[32,16], index: 3, kind: input, shape index: {}]
  %s4 = inlined_call_operand.vmem [shape: f32[1,16], index: 4, kind: input, shape index: {}]
  %s5 = inlined_call_operand.<no memory space> [shape: f32[1], index: 5, kind: input, shape index: {}]
  %s6 = inlined_call_operand.hbm [shape: f32[2,32], index: 6, kind: output, shape index: {0}]
  %s7 = inlined_call_operand.hbm [shape: f32[2,8], index: 7, kind: output, shape index: {1}]
  %8 = xla_tuple %s6, %s7
  %s9 = sld [smem:[#allocation0]]
  $region42: #{tpu_custom_call.1} parent=0
    _
  %s11 = ssub.s32 1, %s9
  %s12 = scalar_select 0, %s11, %s9
  %13 = sst [smem:[#allocation2]] %s5
  $region1: #{tpu_custom_call.1} parent=0
    #allocation3 [shape = 'u8[1024]{0}', space=vmem, size = 0x400, scoped, tag = 'output window, operand 0, single buffered']
    #allocation4 [shape = 's32[1]{0}', space=sflag, size = 0x4, scoped, tag = 'scoped memory for tpu_custom_call.1']
    #allocation5 [shape = 'u8[1024]{0}', space=vmem, size = 0x400, scoped, tag = 'output window, operand 1, single buffered']
    #allocation6 [shape = 's32[1]{0}', space=sflag, size = 0x4, scoped, tag = 'scoped memory for tpu_custom_call.1']
    %14 = vsyncpa [#allocation4], 0
    %15 = vsyncpa [#allocation6], 0
    // Predicated region
    $region2: #{tpu_custom_call.1} parent=1 // pred_check
      _
    $region3: #{tpu_custom_call.1} parent=1 // pred_check_branch
      %17 = sbr.rel (0) target = $region5
    $region4: #{tpu_custom_call.1} parent=1 // pred_region
      _
    $region5: #{tpu_custom_call.1} parent=1 // pred_fallthru
      _
    // Predicated region
    $region6: #{tpu_custom_call.1} parent=1 // pred_check
      _
    $region7: #{tpu_custom_call.1} parent=1 // pred_check_branch
      %19 = sbr.rel (0) target = $region9
    $region8: #{tpu_custom_call.1} parent=1 // pred_region
      _
    $region9: #{tpu_custom_call.1} parent=1 // pred_fallthru
      _
    // Predicated region
    $region10: #{tpu_custom_call.1} parent=1 // pred_check
      _
    $region11: #{tpu_custom_call.1} parent=1 // pred_check_branch
      %21 = sbr.rel (0) target = $region13
    $region12: #{tpu_custom_call.1} parent=1 // pred_region
      _
    $region13: #{tpu_custom_call.1} parent=1 // pred_fallthru
      _
    // Predicated region
    $region14: #{tpu_custom_call.1} parent=1 // pred_check
      _
    $region15: #{tpu_custom_call.1} parent=1 // pred_check_branch
      %23 = sbr.rel (0) target = $region17
    $region16: #{tpu_custom_call.1} parent=1 // pred_region
      _
    $region17: #{tpu_custom_call.1} parent=1 // pred_fallthru
      _
    // Predicated region
    $region18: #{tpu_custom_call.1} parent=1 // pred_check
      _
    $region19: #{tpu_custom_call.1} parent=1 // pred_check_branch
      %25 = sbr.rel (0) target = $region21
    $region20: #{tpu_custom_call.1} parent=1 // pred_region
      _
    $region21: #{tpu_custom_call.1} parent=1 // pred_fallthru
      _
    // Predicated region
    $region22: #{tpu_custom_call.1} parent=1 // pred_check
      _
    $region23: #{tpu_custom_call.1} parent=1 // pred_check_branch
      %27 = sbr.rel (0) target = $region25
    $region24: #{tpu_custom_call.1} parent=1 // pred_region
      _
    $region25: #{tpu_custom_call.1} parent=1 // pred_fallthru
      _
    %v29 = vld [vmem:[%s0] sm:$0xff]
    %v30 = vld [vmem:[%s0 + $0x8] sm:$0xff]
    %v31 = vld [vmem:[%s1] sm:$0x3]
    %v32 = vld [vmem:[%s1 + $0x2] sm:$0x3]
    %vm33 = vcmask 254976
    %v34 = vsel %vm33, %v31, 0.0
    %v35 = vsel %vm33, %v32, 0.0
    %v36 = vadd.f32 %v34, %v35
    %v37 = vrcp.pop 2.0
    %v38 = vmul.f32 %v36, %v37
    %v39 = vpack.c.bf16 %v38, %v38
    %v40 = vld [vmem:[%s2] sm:$0xff]
    %v41 = vld [vmem:[%s2 + $0x8] sm:$0xff]
    %v42 = vld [vmem:[%s2 + $0x10] sm:$0xff]
    %v43 = vld [vmem:[%s2 + $0x18] sm:$0xff]
    %v44 = vpack.c.bf16 %v41, %v40
    %v45 = vpack.c.bf16 %v43, %v42
    %vm46 = vcmask 261120
    %v48 = vsel %vm46, %v39, 0
    %50 = vmatprep.subr.bf16.mxu0 0
    %51 = vmatpush1.bf16.msra.mxu0 0
    %52 = vmatprep.subr.bf16.mxu0 0
    %53 = vmatpush1.bf16.msra.mxu0 0
    %54 = vmatprep.subr.bf16.mxu0 0
    %55 = vmatpush1.bf16.msra.mxu0 0
    %56 = vmatprep.subr.bf16.mxu0 0
    %57 = vmatpush1.bf16.msra.mxu0 0
    %58 = vmatprep.subr.bf16.mxu0 0
    %59 = vmatpush1.bf16.msra.mxu0 0
    %60 = vmatprep.subr.bf16.mxu0 0
    %61 = vmatpush1.bf16.msra.mxu0 0
    %62 = vmatprep.subr.bf16.mxu0 0
    %63 = vmatpush1.bf16.msra.mxu0 %v45
    %64 = vmatprep.subr.bf16.mxu0 0
    %65 = vmatpush1.bf16.msra.mxu0 %v44
    %66 = vmatprep.subr.bf16.mxu0 0
    %67 = vmatpush2.bf16.msra.mxu0 0
    %68 = vmatprep.subr.bf16.mxu0 0
    %69 = vmatpush2.bf16.msra.mxu0 0
    %70 = vmatprep.subr.bf16.mxu0 0
    %71 = vmatpush2.bf16.msra.mxu0 0
    %72 = vmatprep.subr.bf16.mxu0 0
    %73 = vmatpush2.bf16.msra.mxu0 0
    %74 = vmatprep.subr.bf16.mxu0 0
    %75 = vmatpush2.bf16.msra.mxu0 0
    %76 = vmatprep.subr.bf16.mxu0 0
    %77 = vmatpush2.bf16.msra.mxu0 0
    %78 = vmatprep.subr.bf16.mxu0 0
    %79 = vmatpush2.bf16.msra.mxu0 0
    %80 = vmatprep.subr.bf16.mxu0 0
    %81 = vmatpush2.bf16.msra.mxu0 0
    %82 = vmatprep.mubr.bf16.mxu0 0
    %83 = vmatmul.mubr.bf16.gmra.mxu0 %v48
    %v84 = vpop.f32.mrf.mxu0
    %v85 = vadd.f32 0.0, %v84
    %v86 = vpop.f32.mrf.mxu0
    %v87 = vpop.f32.mrf.mxu0
    %v88 = vpop.f32.mrf.mxu0
    %89 = vdwg.mxu0
    %v90 = vpack.c.bf16 %v30, %v29
    %v91 = vld [vmem:[%s3] sm:$0xff]
    %v92 = vld [vmem:[%s3 + $0x8] sm:$0xff]
    %v93 = vld [vmem:[%s3 + $0x10] sm:$0xff]
    %v94 = vld [vmem:[%s3 + $0x18] sm:$0xff]
    %v95 = vpack.c.bf16 %v92, %v91
    %v96 = vpack.c.bf16 %v94, %v93
    %v98 = vsel %vm46, %v90, 0
    %100 = vmatprep.subr.bf16.mxu0 0
    %101 = vmatpush1.bf16.msra.mxu0 0
    %102 = vmatprep.subr.bf16.mxu0 0
    %103 = vmatpush1.bf16.msra.mxu0 0
    %104 = vmatprep.subr.bf16.mxu0 0
    %105 = vmatpush1.bf16.msra.mxu0 0
    %106 = vmatprep.subr.bf16.mxu0 0
    %107 = vmatpush1.bf16.msra.mxu0 0
    %108 = vmatprep.subr.bf16.mxu0 0
    %109 = vmatpush1.bf16.msra.mxu0 0
    %110 = vmatprep.subr.bf16.mxu0 0
    %111 = vmatpush1.bf16.msra.mxu0 0
    %112 = vmatprep.subr.bf16.mxu0 0
    %113 = vmatpush1.bf16.msra.mxu0 %v96
    %114 = vmatprep.subr.bf16.mxu0 0
    %115 = vmatpush1.bf16.msra.mxu0 %v95
    %116 = vmatprep.subr.bf16.mxu0 0
    %117 = vmatpush2.bf16.msra.mxu0 0
    %118 = vmatprep.subr.bf16.mxu0 0
    %119 = vmatpush2.bf16.msra.mxu0 0
    %120 = vmatprep.subr.bf16.mxu0 0
    %121 = vmatpush2.bf16.msra.mxu0 0
    %122 = vmatprep.subr.bf16.mxu0 0
    %123 = vmatpush2.bf16.msra.mxu0 0
    %124 = vmatprep.subr.bf16.mxu0 0
    %125 = vmatpush2.bf16.msra.mxu0 0
    %126 = vmatprep.subr.bf16.mxu0 0
    %127 = vmatpush2.bf16.msra.mxu0 0
    %128 = vmatprep.subr.bf16.mxu0 0
    %129 = vmatpush2.bf16.msra.mxu0 0
    %130 = vmatprep.subr.bf16.mxu0 0
    %131 = vmatpush2.bf16.msra.mxu0 0
    %132 = vmatprep.mubr.bf16.mxu0 0
    %133 = vmatmul.mubr.bf16.gmra.mxu0 %v98
    %v134 = vpop.f32.mrf.mxu0
    %v135 = vadd.f32 0.0, %v134
    %v136 = vpop.f32.mrf.mxu0
    %v137 = vpop.f32.mrf.mxu0
    %v138 = vadd.f32 0.0, %v137
    %v139 = vpop.f32.mrf.mxu0
    %140 = vdwg.mxu0
    %v143 = vunpack.c.l.s4 1966171168
    %v144 = vunpack.c.0.s8 %v143
    %v145 = vlaneseq
    %v146 = vshrl.u32 %v145, 7
    %v147 = vsub.s32 %v144, %v146
    %v148 = vrot.slane %v85, %v147
    %v149 = vcombine.high %v148, %v148
    %v151 = vunpack.c.l.s4 1966171168
    %v152 = vunpack.c.0.s8 %v151
    %v153 = vlaneseq
    %v154 = vshrl.u32 %v153, 7
    %v155 = vsub.s32 %v152, %v154
    %v156 = vrot.slane %v148, %v155
    %v158 = vunpack.c.l.s4 1966171168
    %v159 = vunpack.c.0.s8 %v158
    %v160 = vlaneseq
    %v161 = vshrl.u32 %v160, 7
    %v162 = vsub.s32 %v159, %v161
    %v163 = vrot.slane %v149, %v162
    %v164 = vlaneseq
    %v165 = vshrl.u32 %v164, 7
    %v166 = vsub.s32 0, %v165
    %v167 = vrot.slane %v156, %v166
    %v168 = vlaneseq
    %v169 = vshrl.u32 %v168, 7
    %v170 = vsub.s32 0, %v169
    %v171 = vrot.slane %v163, %v170
    %v174 = vadd.f32 %v167, %v135
    %v175 = vadd.f32 %v171, %v138
    %v176 = vtanh.pop %v174
    %v177 = vtanh.pop %v175
    %v178 = vld [vmem:[%s4] sm:$0x1]
    %v180 = vlaneseq
    %v181 = vshrl.u32 %v180, 7
    %v182 = vsub.s32 0, %v181
    %v183 = vrot.slane %v178, %v182
    %v185 = vmul.f32 %v176, %v183
    %v186 = vmul.f32 %v177, %v183
    %vm187 = vcmask 130048
    %v188 = vsel %vm187, %v185, 0.0
    %189 = vadd.xlane.f32.xlu0 %v188
    %v190 = vpop.xlane.xlu0 %189
    %v191 = vsel %vm187, %v186, 0.0
    %192 = vadd.xlane.f32.xlu0 %v191
    %v193 = vpop.xlane.xlu0 %192
    %s194 = sld [smem:[#allocation2]]
    %v195 = vstv %s194
    %v196 = vadd.f32 %v190, %v195
    %v197 = vadd.f32 %v193, %v195
    %v200 = vlaneseq
    %v201 = vand.u32 %v200, 127
    %v202 = vlaneseq
    %v203 = vshrl.u32 %v202, 7
    %v204 = vsub.s32 %v201, %v203
    %v205 = vrot.slane %v196, %v204
    %v206 = vlaneseq
    %v207 = vshrl.u32 %v206, 7
    %v208 = vsub.s32 %v201, %v207
    %v209 = vrot.slane %v197, %v208
    %vm210 = vcmask 1041409
    %v211 = vsel %vm210, %v209, %v205
    %vm213 = vcmask 58368
    %v214 = vsel %vm213, %v211, -inf
    %215 = vmax.xlane.f32.xlu0 %v214
    %v216 = vpop.xlane.xlu0 %215
    %v218 = vlaneseq
    %v219 = vshrl.u32 %v218, 7
    %v220 = vsub.s32 0, %v219
    %v221 = vrot.slane %v216, %v220
    %v222 = vlaneseq
    %v223 = vshrl.u32 %v222, 7
    %v224 = vsub.s32 1, %v223
    %v225 = vrot.slane %v216, %v224
    %v228 = vsub.f32 %v196, %v221
    %v229 = vsub.f32 %v197, %v225
    %v230 = vmul.f32 %v228, 1.442695
    %v231 = vpow.pop %v230
    %v232 = vmul.f32 %v229, 1.442695
    %v233 = vpow.pop %v232
    %236 = vset.pattern.permute.xlu0 0
    %237 = vperm.xlu0 %236, %v231
    %v238 = vpop.permute.xlu0 %237
    %239 = vset.pattern.permute.xlu0 0
    %240 = vperm.xlu0 %239, %v233
    %v241 = vpop.permute.xlu0 %240
    %v242 = vlaneseq
    %v243 = vshrl.u32 %v242, 7
    %v244 = vsub.s32 %v201, %v243
    %v245 = vrot.slane %v238, %v244
    %v246 = vlaneseq
    %v247 = vshrl.u32 %v246, 7
    %v248 = vsub.s32 %v201, %v247
    %v249 = vrot.slane %v241, %v248
    %v250 = vsel %vm210, %v249, %v245
    %v252 = vsel %vm213, %v250, 0.0
    %253 = vadd.xlane.f32.xlu0 %v252
    %v254 = vpop.xlane.xlu0 %253
    %v255 = vrcp.pop %v254
    %v257 = vlaneseq
    %v258 = vshrl.u32 %v257, 7
    %v259 = vsub.s32 0, %v258
    %v260 = vrot.slane %v255, %v259
    %v261 = vlaneseq
    %v262 = vshrl.u32 %v261, 7
    %v263 = vsub.s32 1, %v262
    %v264 = vrot.slane %v255, %v263
    %v267 = vmul.f32 %v231, %v260
    %v268 = vmul.f32 %v233, %v264
    %270 = vset.pattern.permute.xlu0 0
    %271 = vperm.xlu0 %270, %v267
    %v272 = vpop.permute.xlu0 %271
    %275 = vset.pattern.permute.xlu0 0
    %276 = vperm.xlu0 %275, %v268
    %v277 = vpop.permute.xlu0 %276
    %v279 = vmul.f32 %v272, %v29
    %v280 = vmul.f32 %v277, %v30
    %v281 = vsel %vm46, %v279, 0.0
    %v282 = vrot.slane %v281, 4
    %v283 = vadd.f32 %v281, %v282
    %v284 = vrot.slane %v283, 2
    %v285 = vadd.f32 %v283, %v284
    %v286 = vrot.slane %v285, 1
    %v287 = vadd.f32 %v285, %v286
    %v288 = vsel %vm46, %v280, 0.0
    %v289 = vrot.slane %v288, 4
    %v290 = vadd.f32 %v288, %v289
    %v291 = vrot.slane %v290, 2
    %v292 = vadd.f32 %v290, %v291
    %v293 = vrot.slane %v292, 1
    %v294 = vadd.f32 %v292, %v293
    %v297 = vsel %vm210, %v294, %v287
    %299 = vst.msk [vmem:[#allocation3] sm:$0x3] %vm33, %v297
    %v300 = vlaneseq
    %v301 = vshrl.u32 %v300, 7
    %v302 = vsub.s32 %v201, %v301
    %v303 = vrot.slane %v272, %v302
    %v304 = vlaneseq
    %v305 = vshrl.u32 %v304, 7
    %v306 = vsub.s32 %v201, %v305
    %v307 = vrot.slane %v277, %v306
    %v308 = vsel %vm210, %v307, %v303
    %310 = vst.msk [vmem:[#allocation5] sm:$0x3] %vm213, %v308
    // Predicated region
    $region26: #{tpu_custom_call.1} parent=1 // pred_check
      _
    $region27: #{tpu_custom_call.1} parent=1 // pred_check_branch
      %312 = sbr.rel (0) target = $region29
    $region28: #{tpu_custom_call.1} parent=1 // pred_region
      %s314 = ssub.s32 32, 32
      %315 = vsyncadd [#allocation4], %s314
      %s317 = sshll.u32 [#allocation3], 4
      %s318 = int_to_ptr.vmem [resolvable:$true] %s317
      %320 = dma.vmem_to_hbm [thread:$0]  %s318, 32, %s6, [#allocation4]
    $region29: #{tpu_custom_call.1} parent=1 // pred_fallthru
      _
    // Predicated region
    $region30: #{tpu_custom_call.1} parent=1 // pred_check
      _
    $region31: #{tpu_custom_call.1} parent=1 // pred_check_branch
      %322 = sbr.rel (0) target = $region33
    $region32: #{tpu_custom_call.1} parent=1 // pred_region
      %s324 = ssub.s32 32, 32
      %325 = vsyncadd [#allocation6], %s324
      %s327 = sshll.u32 [#allocation5], 4
      %s328 = int_to_ptr.vmem [resolvable:$true] %s327
      %330 = dma.vmem_to_hbm [thread:$0]  %s328, 32, %s7, [#allocation6]
    $region33: #{tpu_custom_call.1} parent=1 // pred_fallthru
      _
    // Predicated region
    $region34: #{tpu_custom_call.1} parent=1 // pred_check
      _
    $region35: #{tpu_custom_call.1} parent=1 // pred_check_branch
      %332 = sbr.rel (0) target = $region37
    $region36: #{tpu_custom_call.1} parent=1 // pred_region
      %333 = dma.done [#allocation4], 32
    $region37: #{tpu_custom_call.1} parent=1 // pred_fallthru
      _
    // Predicated region
    $region38: #{tpu_custom_call.1} parent=1 // pred_check
      _
    $region39: #{tpu_custom_call.1} parent=1 // pred_check_branch
      %335 = sbr.rel (0) target = $region41
    $region40: #{tpu_custom_call.1} parent=1 // pred_region
      %336 = dma.done [#allocation6], 32
    $region41: #{tpu_custom_call.1} parent=1 // pred_fallthru
      _
    %337 = vsyncpa [#allocation4], 1
    %338 = vsyncpa [#allocation6], 1

</llo_original>
